<compile_context>
chip_gen: v6e
topology: v6e:2x2x1
jax: 0.10.0
libtpu: 0.0.40
codegen_flags: <defaults>
</compile_context>

<pallas_src>
import functools

import jax
import jax.numpy as jnp
from jax.experimental import pallas as pl
from jax.experimental.pallas import tpu as pltpu


def _round_up(x, m):
    return ((x + m - 1) // m) * m


def attribute_network_kernel(x_ref, w1_ref, b1_ref, w2_ref, b2_ref, out_ref,
                             *, matmul_dtype):
    """Fused MLP forward: relu(relu(x @ w1 + b1) @ w2 + b2).

    x arrives in its native dtype (f32) and is cast to the matmul dtype inside
    the kernel; accumulation, bias-add and ReLU run in f32 on the VPU (safe on
    v5e which has no bf16 VPU).
    """
    x = x_ref[...].astype(matmul_dtype)              # (tb, D_in)
    w1 = w1_ref[...]                                 # (D_in, H)   matmul dtype
    w2 = w2_ref[...]                                 # (H, D_out)  matmul dtype
    b1 = b1_ref[...]                                 # (1, H)      f32
    b2 = b2_ref[...]                                 # (1, D_out)  f32

    h = jnp.dot(x, w1, preferred_element_type=jnp.float32) + b1
    h = jnp.maximum(h, 0.0)                          # ReLU (f32, VPU)

    o = jnp.dot(h.astype(matmul_dtype), w2,
                preferred_element_type=jnp.float32) + b2
    o = jnp.maximum(o, 0.0)                          # ReLU (f32, VPU)

    out_ref[...] = o.astype(out_ref.dtype)


def attribute_network_forward(x, w1, b1, w2, b2, *, block_b=2048,
                              matmul_dtype=jnp.bfloat16):
    """relu(relu(x @ w1 + b1) @ w2 + b2), returns (B, D_out) float32.

    x: (B, D_in) f32; w1: (D_in, H); b1: (1, H); w2: (H, D_out); b2: (1, D_out).
    """
    B, D_in = x.shape
    H = w1.shape[1]
    D_out = w2.shape[1]
    assert w1.shape == (D_in, H)
    assert b1.shape == (1, H)
    assert w2.shape == (H, D_out)
    assert b2.shape == (1, D_out)

    # Weights/biases are tiny: a one-time wrapper cast is negligible HBM
    # traffic and avoids re-casting them inside every grid step.
    w1 = w1.astype(matmul_dtype)
    w2 = w2.astype(matmul_dtype)
    b1 = b1.astype(jnp.float32)
    b2 = b2.astype(jnp.float32)

    kernel = functools.partial(attribute_network_kernel,
                               matmul_dtype=matmul_dtype)
    out_shape = jax.ShapeDtypeStruct((B, D_out), jnp.float32)

    mm_bytes = jnp.dtype(matmul_dtype).itemsize
    cost = pl.CostEstimate(
        flops=2 * B * (D_in * H + H * D_out),
        transcendentals=0,
        bytes_accessed=(B * (D_in + D_out) * 4
                        + (D_in * H + H * D_out) * mm_bytes
                        + (H + D_out) * 4),
    )

    if B <= block_b:
        # Small-batch path: no grid, single VMEM blocks -- no pipeline
        # prologue/epilogue, no double buffering.
        vmem_spec = pl.BlockSpec(memory_space=pltpu.MemorySpace.VMEM)
        return pl.pallas_call(
            kernel,
            out_shape=out_shape,
            in_specs=[vmem_spec] * 5,
            out_specs=vmem_spec,
            cost_estimate=cost,
        )(x, w1, b1, w2, b2)

    # Batch-tiled path: pick tb (multiple of 8) so the grid length is even
    # (v7x shards the "parallel" batch axis across its 2 TensorCores).  The
    # partial last tile is masked by Pallas, so no batch padding is needed.
    n_tiles = pl.cdiv(B, block_b)
    if n_tiles % 2:
        n_tiles += 1
    tb = _round_up(pl.cdiv(B, n_tiles), 8)
    grid = (pl.cdiv(B, tb),)

    return pl.pallas_call(
        kernel,
        out_shape=out_shape,
        grid=grid,
        in_specs=[
            pl.BlockSpec((tb, D_in), lambda i: (i, 0)),   # x tiled over batch
            pl.BlockSpec((D_in, H), lambda i: (0, 0)),    # w1 resident in VMEM
            pl.BlockSpec((1, H), lambda i: (0, 0)),       # b1 resident
            pl.BlockSpec((H, D_out), lambda i: (0, 0)),   # w2 resident
            pl.BlockSpec((1, D_out), lambda i: (0, 0)),   # b2 resident
        ],
        out_specs=pl.BlockSpec((tb, D_out), lambda i: (i, 0)),
        compiler_params=pltpu.CompilerParams(
            dimension_semantics=("parallel",)),
        cost_estimate=cost,
    )(x, w1, b1, w2, b2)


def reference_forward(x, w1, b1, w2, b2, matmul_dtype=jnp.bfloat16):
    """Pure-JAX reference with the same matmul-dtype / f32-accumulate numerics."""
    h = jnp.dot(x.astype(matmul_dtype), w1.astype(matmul_dtype),
                preferred_element_type=jnp.float32) + b1
    h = jnp.maximum(h, 0.0)
    o = jnp.dot(h.astype(matmul_dtype), w2.astype(matmul_dtype),
                preferred_element_type=jnp.float32) + b2
    return jnp.maximum(o, 0.0)


def init_params(key, input_size, hidden_size, output_size):
    """PyTorch-Linear-like uniform init; weights stored as (in, out)."""
    k1, k2, k3, k4 = jax.random.split(key, 4)
    bound1 = 1.0 / jnp.sqrt(input_size)
    bound2 = 1.0 / jnp.sqrt(hidden_size)
    w1 = jax.random.uniform(k1, (input_size, hidden_size), jnp.float32,
                            -bound1, bound1)
    b1 = jax.random.uniform(k2, (1, hidden_size), jnp.float32, -bound1, bound1)
    w2 = jax.random.uniform(k3, (hidden_size, output_size), jnp.float32,
                            -bound2, bound2)
    b2 = jax.random.uniform(k4, (1, output_size), jnp.float32, -bound2, bound2)
    return w1, b1, w2, b2


if __name__ == "__main__":
    # MNIST-ZSL-ish shapes: input=256, hidden=128, output=64.
    B, INPUT, HIDDEN, OUTPUT = 8, 256, 128, 64

    key = jax.random.PRNGKey(0)
    kx, kp = jax.random.split(key)
    x = jax.random.normal(kx, (B, INPUT), dtype=jnp.float32)
    w1, b1, w2, b2 = init_params(kp, INPUT, HIDDEN, OUTPUT)

    # Path 1: small batch -> grid-less single-VMEM-block kernel (bf16 matmul).
    out_small = jax.block_until_ready(
        attribute_network_forward(x, w1, b1, w2, b2))
    ref_small = reference_forward(x, w1, b1, w2, b2)
    assert out_small.shape == (B, OUTPUT)
    assert jnp.allclose(out_small, ref_small, atol=1e-2, rtol=1e-2)

    # Path 1b: strict f32 parity mode vs. an f32 reference (tight tolerance).
    out_f32 = jax.block_until_ready(
        attribute_network_forward(x, w1, b1, w2, b2,
                                  matmul_dtype=jnp.float32))
    ref_f32 = reference_forward(x, w1, b1, w2, b2, matmul_dtype=jnp.float32)
    assert jnp.allclose(out_f32, ref_f32, atol=1e-5, rtol=1e-5)

    # Path 2: larger batch -> batch-tiled grid (even grid length, tb=80).
    B2 = 320
    x2 = jax.random.normal(jax.random.PRNGKey(1), (B2, INPUT), dtype=jnp.float32)
    out_big = jax.block_until_ready(
        attribute_network_forward(x2, w1, b1, w2, b2, block_b=128))
    ref_big = reference_forward(x2, w1, b1, w2, b2)
    assert out_big.shape == (B2, OUTPUT)
    assert jnp.allclose(out_big, ref_big, atol=1e-2, rtol=1e-2)

    # Path 3: batch not divisible by the tile -> masked partial last tile,
    # no batch padding or post-slice anywhere.
    B3 = 300
    x3 = jax.random.normal(jax.random.PRNGKey(2), (B3, INPUT), dtype=jnp.float32)
    out_rag = jax.block_until_ready(
        attribute_network_forward(x3, w1, b1, w2, b2, block_b=128))
    ref_rag = reference_forward(x3, w1, b1, w2, b2)
    assert out_rag.shape == (B3, OUTPUT)
    assert jnp.allclose(out_rag, ref_rag, atol=1e-2, rtol=1e-2)

    print("KERNEL_OK")
</pallas_src>

<mosaic_0001>
module attributes {stable_mosaic.version = 11 : i64} {
  func.func @attribute_network_kernel(%arg0: memref<8x256xf32, #tpu.memory_space<vmem>>, %arg1: memref<256x128xbf16, #tpu.memory_space<vmem>>, %arg2: memref<1x128xf32, #tpu.memory_space<vmem>>, %arg3: memref<128x64xbf16, #tpu.memory_space<vmem>>, %arg4: memref<1x64xf32, #tpu.memory_space<vmem>>, %arg5: memref<8x64xf32, #tpu.memory_space<vmem>>) attributes {dimension_semantics = [], scalar_prefetch = 0 : i64, scratch_operands = 0 : i64, tpu.core_type = #tpu.core_type<tc>} {
    %c0 = arith.constant 0 : index
    %c0_0 = arith.constant 0 : index
    %0 = vector.load %arg0[%c0, %c0_0] : memref<8x256xf32, #tpu.memory_space<vmem>>, vector<8x256xf32>
    %1 = arith.truncf %0 : vector<8x256xf32> to vector<8x256xbf16>
    %c0_1 = arith.constant 0 : index
    %c0_2 = arith.constant 0 : index
    %2 = vector.load %arg1[%c0_1, %c0_2] : memref<256x128xbf16, #tpu.memory_space<vmem>>, vector<256x128xbf16>
    %c0_3 = arith.constant 0 : index
    %c0_4 = arith.constant 0 : index
    %3 = vector.load %arg3[%c0_3, %c0_4] : memref<128x64xbf16, #tpu.memory_space<vmem>>, vector<128x64xbf16>
    %c0_5 = arith.constant 0 : index
    %c0_6 = arith.constant 0 : index
    %4 = vector.load %arg2[%c0_5, %c0_6] : memref<1x128xf32, #tpu.memory_space<vmem>>, vector<1x128xf32>
    %c0_7 = arith.constant 0 : index
    %c0_8 = arith.constant 0 : index
    %5 = vector.load %arg4[%c0_7, %c0_8] : memref<1x64xf32, #tpu.memory_space<vmem>>, vector<1x64xf32>
    %cst = arith.constant dense<0.000000e+00> : vector<8x128xf32>
    %6 = tpu.matmul %1, %2, %cst {dimension_numbers = #tpu.dot_dimension_numbers<[1], [0], [0], [1], [0, 0, 1, 1], [], []>} : vector<8x256xbf16>, vector<256x128xbf16>, vector<8x128xf32> -> vector<8x128xf32>
    %7 = vector.broadcast %4 : vector<1x128xf32> to vector<8x128xf32>
    %8 = arith.addf %6, %7 : vector<8x128xf32>
    %cst_9 = arith.constant 0.000000e+00 : f32
    %9 = vector.broadcast %cst_9 : f32 to vector<8x128xf32>
    %10 = arith.maximumf %8, %9 : vector<8x128xf32>
    %11 = arith.truncf %10 : vector<8x128xf32> to vector<8x128xbf16>
    %cst_10 = arith.constant dense<0.000000e+00> : vector<8x64xf32>
    %12 = tpu.matmul %11, %3, %cst_10 {dimension_numbers = #tpu.dot_dimension_numbers<[1], [0], [0], [1], [0, 0, 1, 1], [], []>} : vector<8x128xbf16>, vector<128x64xbf16>, vector<8x64xf32> -> vector<8x64xf32>
    %13 = vector.broadcast %5 : vector<1x64xf32> to vector<8x64xf32>
    %14 = arith.addf %12, %13 : vector<8x64xf32>
    %cst_11 = arith.constant 0.000000e+00 : f32
    %15 = vector.broadcast %cst_11 : f32 to vector<8x64xf32>
    %16 = arith.maximumf %14, %15 : vector<8x64xf32>
    %c0_12 = arith.constant 0 : index
    %c0_13 = arith.constant 0 : index
    %17 = vector.load %arg5[%c0_12, %c0_13] : memref<8x64xf32, #tpu.memory_space<vmem>>, vector<8x64xf32>
    tpu.vector_store %arg5[%c0_12, %c0_13], %16 {strides = array<i32>} : memref<8x64xf32, #tpu.memory_space<vmem>>, vector<8x64xf32>,
    return
  }
}

</mosaic_0001>

<llo_original>
// kernel: tpu_custom_call.1
$region0: #{tpu_custom_call.1}
  #allocation0 [shape = 'u32[]', space=smem, size = 0x4, offset = 0x4, fixed_abs, tag = 'smem constant byte address 0x4 - core index']
  #allocation1 [shape = 'u32[144,128]{1,0:T(1,128)}', space=vmem, size = 0x12000, scoped, tag = 'internal scratch']
  %s0 = inlined_call_operand.vmem [shape: f32[8,256], index: 0, kind: input, shape index: {}]
  %s1 = inlined_call_operand.hbm [shape: bf16[256,128], index: 1, kind: input, shape index: {}]
  %s2 = inlined_call_operand.vmem [shape: f32[1,128], index: 2, kind: input, shape index: {}]
  %s3 = inlined_call_operand.vmem [shape: bf16[128,64], index: 3, kind: input, shape index: {}]
  %s4 = inlined_call_operand.vmem [shape: f32[1,64], index: 4, kind: input, shape index: {}]
  %s5 = inlined_call_operand.hbm [shape: f32[8,64], index: 5, kind: output, shape index: {}]
  %s6 = sld [smem:[#allocation0]]
  $region34: #{tpu_custom_call.1} parent=0
    _
  %s8 = ssub.s32 1, %s6
  %s9 = scalar_select 0, %s8, %s6
  $region1: #{tpu_custom_call.1} parent=0
    #allocation2 [shape = 'u8[65536]{0}', space=vmem, size = 0x10000, scoped, tag = 'input window, operand 1, single buffered']
    #allocation3 [shape = 's32[1]{0}', space=sflag, size = 0x4, scoped, tag = 'scoped memory for tpu_custom_call.1']
    #allocation4 [shape = 's32[1]{0}', space=sflag, size = 0x4, scoped, tag = 'scoped memory for tpu_custom_call.1']
    #allocation5 [shape = 'u8[4096]{0}', space=vmem, size = 0x1000, scoped, tag = 'output window, operand 0, single buffered']
    %10 = vsyncpa [#allocation3], 0
    %11 = vsyncpa [#allocation4], 0
    // Predicated region
    $region2: #{tpu_custom_call.1} parent=1 // pred_check
      _
    $region3: #{tpu_custom_call.1} parent=1 // pred_check_branch
      %13 = sbr.rel (0) target = $region5
    $region4: #{tpu_custom_call.1} parent=1 // pred_region
      _
    $region5: #{tpu_custom_call.1} parent=1 // pred_fallthru
      _
    // Predicated region
    $region6: #{tpu_custom_call.1} parent=1 // pred_check
      _
    $region7: #{tpu_custom_call.1} parent=1 // pred_check_branch
      %15 = sbr.rel (0) target = $region9
    $region8: #{tpu_custom_call.1} parent=1 // pred_region
      %s17 = ssub.s32 2048, 2048
      %18 = vsyncadd [#allocation3], %s17
      %s19 = sshll.u32 [#allocation2], 4
      %s20 = int_to_ptr.vmem [resolvable:$true] %s19
      %25 = dma.hbm_to_vmem [thread:$0]  %s1, 2048, %s20, [#allocation3], 64, 64, 4
    $region9: #{tpu_custom_call.1} parent=1 // pred_fallthru
      _
    // Predicated region
    $region10: #{tpu_custom_call.1} parent=1 // pred_check
      _
    $region11: #{tpu_custom_call.1} parent=1 // pred_check_branch
      %27 = sbr.rel (0) target = $region13
    $region12: #{tpu_custom_call.1} parent=1 // pred_region
      _
    $region13: #{tpu_custom_call.1} parent=1 // pred_fallthru
      _
    // Predicated region
    $region14: #{tpu_custom_call.1} parent=1 // pred_check
      _
    $region15: #{tpu_custom_call.1} parent=1 // pred_check_branch
      %29 = sbr.rel (0) target = $region17
    $region16: #{tpu_custom_call.1} parent=1 // pred_region
      _
    $region17: #{tpu_custom_call.1} parent=1 // pred_fallthru
      _
    // Predicated region
    $region18: #{tpu_custom_call.1} parent=1 // pred_check
      _
    $region19: #{tpu_custom_call.1} parent=1 // pred_check_branch
      %31 = sbr.rel (0) target = $region21
    $region20: #{tpu_custom_call.1} parent=1 // pred_region
      _
    $region21: #{tpu_custom_call.1} parent=1 // pred_fallthru
      _
    // Predicated region
    $region22: #{tpu_custom_call.1} parent=1 // pred_check
      _
    $region23: #{tpu_custom_call.1} parent=1 // pred_check_branch
      %33 = sbr.rel (0) target = $region25
    $region24: #{tpu_custom_call.1} parent=1 // pred_region
      %34 = dma.done [#allocation3], 2048
    $region25: #{tpu_custom_call.1} parent=1 // pred_fallthru
      _
    %v36 = vld [vmem:[%s0] sm:$0xff]
    %v37 = vld [vmem:[%s0 + $0x8] sm:$0xff]
    %v38 = vpack.c.bf16 %v36, %v36
    %v39 = vpack.c.bf16 %v37, %v37
    %v40 = vld [vmem:[#allocation2] sm:$0xf]
    %v41 = vld [vmem:[#allocation2 + $0x4] sm:$0xf]
    %v42 = vld [vmem:[#allocation2 + $0x8] sm:$0xf]
    %v43 = vld [vmem:[#allocation2 + $0xc] sm:$0xf]
    %v44 = vld [vmem:[#allocation2 + $0x10] sm:$0xf]
    %v45 = vld [vmem:[#allocation2 + $0x14] sm:$0xf]
    %v46 = vld [vmem:[#allocation2 + $0x18] sm:$0xf]
    %v47 = vld [vmem:[#allocation2 + $0x1c] sm:$0xf]
    %v48 = vld [vmem:[#allocation2 + $0x20] sm:$0xf]
    %v49 = vld [vmem:[#allocation2 + $0x24] sm:$0xf]
    %v50 = vld [vmem:[#allocation2 + $0x28] sm:$0xf]
    %v51 = vld [vmem:[#allocation2 + $0x2c] sm:$0xf]
    %v52 = vld [vmem:[#allocation2 + $0x30] sm:$0xf]
    %v53 = vld [vmem:[#allocation2 + $0x34] sm:$0xf]
    %v54 = vld [vmem:[#allocation2 + $0x38] sm:$0xf]
    %v55 = vld [vmem:[#allocation2 + $0x3c] sm:$0xf]
    %v56 = vld [vmem:[#allocation2 + $0x40] sm:$0xf]
    %v57 = vld [vmem:[#allocation2 + $0x44] sm:$0xf]
    %v58 = vld [vmem:[#allocation2 + $0x48] sm:$0xf]
    %v59 = vld [vmem:[#allocation2 + $0x4c] sm:$0xf]
    %v60 = vld [vmem:[#allocation2 + $0x50] sm:$0xf]
    %v61 = vld [vmem:[#allocation2 + $0x54] sm:$0xf]
    %v62 = vld [vmem:[#allocation2 + $0x58] sm:$0xf]
    %v63 = vld [vmem:[#allocation2 + $0x5c] sm:$0xf]
    %v64 = vld [vmem:[#allocation2 + $0x60] sm:$0xf]
    %v65 = vld [vmem:[#allocation2 + $0x64] sm:$0xf]
    %v66 = vld [vmem:[#allocation2 + $0x68] sm:$0xf]
    %v67 = vld [vmem:[#allocation2 + $0x6c] sm:$0xf]
    %v68 = vld [vmem:[#allocation2 + $0x70] sm:$0xf]
    %v69 = vld [vmem:[#allocation2 + $0x74] sm:$0xf]
    %v70 = vld [vmem:[#allocation2 + $0x78] sm:$0xf]
    %v71 = vld [vmem:[#allocation2 + $0x7c] sm:$0xf]
    %v72 = vld [vmem:[%s3] sm:$0xf]
    %v73 = vld [vmem:[%s3 + $0x4] sm:$0xf]
    %v74 = vld [vmem:[%s3 + $0x8] sm:$0xf]
    %v75 = vld [vmem:[%s3 + $0xc] sm:$0xf]
    %v76 = vld [vmem:[%s3 + $0x10] sm:$0xf]
    %v77 = vld [vmem:[%s3 + $0x14] sm:$0xf]
    %v78 = vld [vmem:[%s3 + $0x18] sm:$0xf]
    %v79 = vld [vmem:[%s3 + $0x1c] sm:$0xf]
    %v80 = vld [vmem:[%s3 + $0x20] sm:$0xf]
    %v81 = vld [vmem:[%s3 + $0x24] sm:$0xf]
    %v82 = vld [vmem:[%s3 + $0x28] sm:$0xf]
    %v83 = vld [vmem:[%s3 + $0x2c] sm:$0xf]
    %v84 = vld [vmem:[%s3 + $0x30] sm:$0xf]
    %v85 = vld [vmem:[%s3 + $0x34] sm:$0xf]
    %v86 = vld [vmem:[%s3 + $0x38] sm:$0xf]
    %v87 = vld [vmem:[%s3 + $0x3c] sm:$0xf]
    %v88 = vld [vmem:[%s2] sm:$0x1]
    %v89 = vld [vmem:[%s4] sm:$0x1]
    %v91 = vlaneseq
    %v92 = vshrl.u32 %v91, 7
    %v93 = vsub.s32 0, %v92
    %v94 = vrot.slane %v88, %v93
    %v128 = vunpack.c.l.b16 %v40
    %v129 = vunpack.c.l.b16 %v41
    %v130 = vunpack.c.l.b16 %v42
    %v131 = vunpack.c.l.b16 %v43
    %v132 = vunpack.c.l.b16 %v44
    %v133 = vunpack.c.l.b16 %v45
    %v134 = vunpack.c.l.b16 %v46
    %v135 = vunpack.c.l.b16 %v47
    %v136 = vunpack.c.l.b16 %v48
    %v137 = vunpack.c.l.b16 %v49
    %v138 = vunpack.c.l.b16 %v50
    %v139 = vunpack.c.l.b16 %v51
    %v140 = vunpack.c.l.b16 %v52
    %v141 = vunpack.c.l.b16 %v53
    %v142 = vunpack.c.l.b16 %v54
    %v143 = vunpack.c.l.b16 %v55
    %v144 = vunpack.c.l.b16 %v56
    %v145 = vunpack.c.l.b16 %v57
    %v146 = vunpack.c.l.b16 %v58
    %v147 = vunpack.c.l.b16 %v59
    %v148 = vunpack.c.l.b16 %v60
    %v149 = vunpack.c.l.b16 %v61
    %v150 = vunpack.c.l.b16 %v62
    %v151 = vunpack.c.l.b16 %v63
    %v152 = vunpack.c.l.b16 %v64
    %v153 = vunpack.c.l.b16 %v65
    %v154 = vunpack.c.l.b16 %v66
    %v155 = vunpack.c.l.b16 %v67
    %v156 = vunpack.c.l.b16 %v68
    %v157 = vunpack.c.l.b16 %v69
    %v158 = vunpack.c.l.b16 %v70
    %v159 = vunpack.c.l.b16 %v71
    %v160 = vpack.c.b16 %v129, %v128
    %v161 = vpack.c.b16 %v131, %v130
    %v162 = vpack.c.b16 %v133, %v132
    %v163 = vpack.c.b16 %v135, %v134
    %v164 = vpack.c.b16 %v137, %v136
    %v165 = vpack.c.b16 %v139, %v138
    %v166 = vpack.c.b16 %v141, %v140
    %v167 = vpack.c.b16 %v143, %v142
    %v168 = vpack.c.b16 %v145, %v144
    %v169 = vpack.c.b16 %v147, %v146
    %v170 = vpack.c.b16 %v149, %v148
    %v171 = vpack.c.b16 %v151, %v150
    %v172 = vpack.c.b16 %v153, %v152
    %v173 = vpack.c.b16 %v155, %v154
    %v174 = vpack.c.b16 %v157, %v156
    %v175 = vpack.c.b16 %v159, %v158
    %192 = vmatprep.subr.bf16.mxu0 0
    %193 = vmatpush1.bf16.msra.mxu0 %v167
    %194 = vmatprep.subr.bf16.mxu0 0
    %195 = vmatpush1.bf16.msra.mxu0 %v166
    %196 = vmatprep.subr.bf16.mxu0 0
    %197 = vmatpush1.bf16.msra.mxu0 %v165
    %198 = vmatprep.subr.bf16.mxu0 0
    %199 = vmatpush1.bf16.msra.mxu0 %v164
    %200 = vmatprep.subr.bf16.mxu0 0
    %201 = vmatpush1.bf16.msra.mxu0 %v163
    %202 = vmatprep.subr.bf16.mxu0 0
    %203 = vmatpush1.bf16.msra.mxu0 %v162
    %204 = vmatprep.subr.bf16.mxu0 0
    %205 = vmatpush1.bf16.msra.mxu0 %v161
    %206 = vmatprep.subr.bf16.mxu0 0
    %207 = vmatpush1.bf16.msra.mxu0 %v160
    %208 = vmatprep.subr.bf16.mxu0 0
    %209 = vmatpush2.bf16.msra.mxu0 %v175
    %210 = vmatprep.subr.bf16.mxu0 0
    %211 = vmatpush2.bf16.msra.mxu0 %v174
    %212 = vmatprep.subr.bf16.mxu0 0
    %213 = vmatpush2.bf16.msra.mxu0 %v173
    %214 = vmatprep.subr.bf16.mxu0 0
    %215 = vmatpush2.bf16.msra.mxu0 %v172
    %216 = vmatprep.subr.bf16.mxu0 0
    %217 = vmatpush2.bf16.msra.mxu0 %v171
    %218 = vmatprep.subr.bf16.mxu0 0
    %219 = vmatpush2.bf16.msra.mxu0 %v170
    %220 = vmatprep.subr.bf16.mxu0 0
    %221 = vmatpush2.bf16.msra.mxu0 %v169
    %222 = vmatprep.subr.bf16.mxu0 0
    %223 = vmatpush2.bf16.msra.mxu0 %v168
    %224 = vmatprep.mubr.bf16.mxu0 %v39
    %225 = vmatmul.mubr.bf16.gmra.mxu0 %v38
    %v226 = vpop.f32.mrf.mxu0
    %v227 = vadd.f32 %v94, %v226
    %v228 = vpop.f32.mrf.mxu0
    %v229 = vpop.f32.mrf.mxu0
    %v230 = vpop.f32.mrf.mxu0
    %231 = vdwg.mxu0
    %v232 = vmax.f32 %v227, 0.0
    %v233 = vpack.c.bf16 %v232, %v232
    %v235 = vlaneseq
    %v236 = vshrl.u32 %v235, 7
    %v237 = vsub.s32 0, %v236
    %v238 = vrot.slane %v89, %v237
    %v256 = vunpack.c.l.b16 %v72
    %v257 = vunpack.c.l.b16 %v73
    %v258 = vunpack.c.l.b16 %v74
    %v259 = vunpack.c.l.b16 %v75
    %v260 = vunpack.c.l.b16 %v76
    %v261 = vunpack.c.l.b16 %v77
    %v262 = vunpack.c.l.b16 %v78
    %v263 = vunpack.c.l.b16 %v79
    %v264 = vunpack.c.l.b16 %v80
    %v265 = vunpack.c.l.b16 %v81
    %v266 = vunpack.c.l.b16 %v82
    %v267 = vunpack.c.l.b16 %v83
    %v268 = vunpack.c.l.b16 %v84
    %v269 = vunpack.c.l.b16 %v85
    %v270 = vunpack.c.l.b16 %v86
    %v271 = vunpack.c.l.b16 %v87
    %v272 = vpack.c.b16 %v257, %v256
    %v273 = vpack.c.b16 %v259, %v258
    %v274 = vpack.c.b16 %v261, %v260
    %v275 = vpack.c.b16 %v263, %v262
    %v276 = vpack.c.b16 %v265, %v264
    %v277 = vpack.c.b16 %v267, %v266
    %v278 = vpack.c.b16 %v269, %v268
    %v279 = vpack.c.b16 %v271, %v270
    %288 = vmatprep.subr.bf16.mxu0 0
    %289 = vmatpush1.bf16.msra.mxu0 %v279
    %290 = vmatprep.subr.bf16.mxu0 0
    %291 = vmatpush1.bf16.msra.mxu0 %v278
    %292 = vmatprep.subr.bf16.mxu0 0
    %293 = vmatpush1.bf16.msra.mxu0 %v277
    %294 = vmatprep.subr.bf16.mxu0 0
    %295 = vmatpush1.bf16.msra.mxu0 %v276
    %296 = vmatprep.subr.bf16.mxu0 0
    %297 = vmatpush1.bf16.msra.mxu0 %v275
    %298 = vmatprep.subr.bf16.mxu0 0
    %299 = vmatpush1.bf16.msra.mxu0 %v274
    %300 = vmatprep.subr.bf16.mxu0 0
    %301 = vmatpush1.bf16.msra.mxu0 %v273
    %302 = vmatprep.subr.bf16.mxu0 0
    %303 = vmatpush1.bf16.msra.mxu0 %v272
    %304 = vmatprep.subr.bf16.mxu0 0
    %305 = vmatpush2.bf16.msra.mxu0 0
    %306 = vmatprep.subr.bf16.mxu0 0
    %307 = vmatpush2.bf16.msra.mxu0 0
    %308 = vmatprep.subr.bf16.mxu0 0
    %309 = vmatpush2.bf16.msra.mxu0 0
    %310 = vmatprep.subr.bf16.mxu0 0
    %311 = vmatpush2.bf16.msra.mxu0 0
    %312 = vmatprep.subr.bf16.mxu0 0
    %313 = vmatpush2.bf16.msra.mxu0 0
    %314 = vmatprep.subr.bf16.mxu0 0
    %315 = vmatpush2.bf16.msra.mxu0 0
    %316 = vmatprep.subr.bf16.mxu0 0
    %317 = vmatpush2.bf16.msra.mxu0 0
    %318 = vmatprep.subr.bf16.mxu0 0
    %319 = vmatpush2.bf16.msra.mxu0 0
    %320 = vmatprep.mubr.bf16.mxu0 0
    %321 = vmatmul.mubr.bf16.gmra.mxu0 %v233
    %v322 = vpop.f32.mrf.mxu0
    %v323 = vadd.f32 %v238, %v322
    %v324 = vpop.f32.mrf.mxu0
    %v325 = vpop.f32.mrf.mxu0
    %v326 = vpop.f32.mrf.mxu0
    %327 = vdwg.mxu0
    %v328 = vmax.f32 %v323, 0.0
    %vm329 = vcmask 523264
    %330 = vst.msk [vmem:[#allocation5] sm:$0xff] %vm329, %v328
    // Predicated region
    $region26: #{tpu_custom_call.1} parent=1 // pred_check
      _
    $region27: #{tpu_custom_call.1} parent=1 // pred_check_branch
      %332 = sbr.rel (0) target = $region29
    $region28: #{tpu_custom_call.1} parent=1 // pred_region
      %s334 = ssub.s32 128, 128
      %335 = vsyncadd [#allocation4], %s334
      %s337 = sshll.u32 [#allocation5], 4
      %s338 = int_to_ptr.vmem [resolvable:$true] %s337
      %340 = dma.vmem_to_hbm [thread:$0]  %s338, 128, %s5, [#allocation4]
    $region29: #{tpu_custom_call.1} parent=1 // pred_fallthru
      _
    // Predicated region
    $region30: #{tpu_custom_call.1} parent=1 // pred_check
      _
    $region31: #{tpu_custom_call.1} parent=1 // pred_check_branch
      %342 = sbr.rel (0) target = $region33
    $region32: #{tpu_custom_call.1} parent=1 // pred_region
      %343 = dma.done [#allocation4], 128
    $region33: #{tpu_custom_call.1} parent=1 // pred_fallthru
      _
    %344 = vsyncpa [#allocation3], 1
    %345 = vsyncpa [#allocation4], 1

</llo_original>
